<compile_context>
chip_gen: v6e
topology: v6e:2x2x1
jax: 0.10.0
libtpu: 0.0.40
codegen_flags: <defaults>
</compile_context>

<pallas_src>
import math

import jax
import jax.numpy as jnp
from jax.experimental import pallas as pl
from jax.experimental.pallas import tpu as pltpu


# ------------------------------ helpers -------------------------------------
def _round_up(v, m):
    return (v + m - 1) // m * m


def _pad2d(a, shape):
    return jnp.pad(a, [(0, s - d) for d, s in zip(a.shape, shape)])


def _vmem_limit_and_caps():
    """Per-generation VMEM limit + tile-size caps."""
    try:
        kind = jax.devices()[0].device_kind.lower()
    except Exception:
        kind = ""
    if "v7" in kind:
        # 64 MiB physical on v7x -> leave double-buffering headroom.
        return 44 << 20, 1024, 2048
    if "v4" in kind or "v5" in kind or "v6" in kind:
        # 128 MiB physical; scoped default (16/32 MiB) must be raised explicitly.
        return 100 << 20, 2048, 4096
    return 44 << 20, 1024, 2048  # unknown part: be conservative


def _divisor_tiles(n_p, cap):
    """Multiples of 128 that divide n_p, descending, capped at `cap`."""
    start = max(128, (min(cap, n_p) // 128) * 128)
    return [t for t in range(start, 127, -128) if n_p % t == 0]


# ----------------------------- Pallas kernels -------------------------------
def project_kernel(x_ref, w_ref, f_ref):
    # feats = X @ W on the MXU, f32 accumulation, stored bf16 for aggregation.
    f_ref[...] = jnp.dot(
        x_ref[...], w_ref[...], preferred_element_type=jnp.float32
    ).astype(f_ref.dtype)


def make_aggregate_kernel(tile_k, feats_resident, compute_dtype):
    def aggregate_kernel(a_ref, f_ref, b_ref, o_ref):
        # out[i-tile] = sum_k A[i-tile, k-tile] @ feats[k-tile]  + bias
        k = pl.program_id(1)

        @pl.when(k == 0)
        def _():
            # Output block index is constant along k -> resident accumulator.
            o_ref[...] = jnp.zeros_like(o_ref)

        # A streams from HBM as f32 (no wrapper pad/cast pass); cast per tile.
        a = a_ref[...].astype(compute_dtype)
        if feats_resident:
            start = pl.multiple_of(k * tile_k, 128)
            f = f_ref[pl.ds(start, tile_k), :]
        else:
            f = f_ref[...]
        o_ref[...] += jnp.dot(a, f, preferred_element_type=jnp.float32)

        @pl.when(k == pl.num_programs(1) - 1)
        def _():
            o_ref[...] += b_ref[...]  # bias added exactly once

    return aggregate_kernel


# ------------------------------- wrapper -------------------------------------
def graph_convolution_pallas(
    adj, x, weight, bias=None, *, compute_dtype=jnp.bfloat16,
    max_tile_i=None, max_tile_k=None, vmem_limit=None,
):
    n, f_in = x.shape
    f_out = weight.shape[1]
    if bias is None:
        bias = jnp.zeros((f_out,), jnp.float32)

    d_vmem, d_ti, d_tk = _vmem_limit_and_caps()
    vmem_limit = d_vmem if vmem_limit is None else vmem_limit
    max_tile_i = d_ti if max_tile_i is None else max_tile_i
    max_tile_k = d_tk if max_tile_k is None else max_tile_k

    # Pad only to the (8,128) layout granularity -- never up to the tile size,
    # and never beyond 128 on f_out ("fill the MXU" would just add HBM bytes).
    f_in_p = _round_up(f_in, 128)
    f_out_p = _round_up(f_out, 128)
    n_p = _round_up(n, 128)

    # Adjacency may already be produced at the padded shape (preferred).
    assert adj.shape[0] == adj.shape[1] and adj.shape[0] in (n, n_p)
    a_p = adj if adj.shape[0] == n_p else _pad2d(adj, (n_p, n_p))
    a_p = a_p.astype(jnp.float32)  # stays f32; bf16 cast happens per tile in-kernel

    x_p = _pad2d(x, (n_p, f_in_p)).astype(compute_dtype)
    w_p = _pad2d(weight, (f_in_p, f_out_p)).astype(compute_dtype)
    b_p = jnp.pad(bias.astype(jnp.float32), (0, f_out_p - f_out)).reshape(1, f_out_p)

    c_item = jnp.dtype(compute_dtype).itemsize
    # Keep feats fully VMEM-resident (DMA'd once) when it comfortably fits.
    feats_resident = (n_p * f_out_p * c_item) <= min(16 << 20, vmem_limit // 4)

    # --- tile selection: largest rectangular (tile_i, tile_k) under budget ---
    budget = int(0.75 * vmem_limit)
    # Keep >= 2 row tiles when possible so the "parallel" axis shards across
    # both TensorCores on v7x.
    ti_cap = min(max_tile_i, n_p // 2) if n_p >= 256 else max_tile_i

    def fits(ti, tk):
        a_buf = 2 * ti * tk * 4                                     # f32 A, x2 buf
        f_buf = 2 * (n_p if feats_resident else tk) * f_out_p * c_item
        o_buf = 2 * ti * f_out_p * 4
        b_buf = 8 * f_out_p * 4
        return a_buf + f_buf + o_buf + b_buf <= budget

    tile_i, tile_k = 128, 128
    for ti in _divisor_tiles(n_p, ti_cap):
        ok = [tk for tk in _divisor_tiles(n_p, max_tile_k) if fits(ti, tk)]
        if ok:
            tile_i, tile_k = ti, ok[0]
            break

    # ---- feats = X @ W : computed once (hoisted out of the reduction) ------
    feats = pl.pallas_call(
        project_kernel,
        out_shape=jax.ShapeDtypeStruct((n_p, f_out_p), compute_dtype),
        grid=(n_p // tile_i,),
        in_specs=[
            pl.BlockSpec((tile_i, f_in_p), lambda i: (i, 0)),
            pl.BlockSpec((f_in_p, f_out_p), lambda i: (0, 0)),
        ],
        out_specs=pl.BlockSpec((tile_i, f_out_p), lambda i: (i, 0)),
        compiler_params=pltpu.CompilerParams(
            dimension_semantics=("parallel",),
            vmem_limit_bytes=vmem_limit,
        ),
    )(x_p, w_p)

    # ---- out = A @ feats + bias : gridded reduction over adjacency cols ----
    if feats_resident:
        f_spec = pl.BlockSpec((n_p, f_out_p), lambda i, k: (0, 0))
        feats_reads = 1
    else:
        f_spec = pl.BlockSpec((tile_k, f_out_p), lambda i, k: (k, 0))
        feats_reads = n_p // tile_i

    cost = pl.CostEstimate(
        flops=2 * n_p * n_p * f_out_p,
        transcendentals=0,
        bytes_accessed=(
            n_p * n_p * 4                              # f32 adjacency stream
            + feats_reads * n_p * f_out_p * c_item     # feats (resident or re-read)
            + n_p * f_out_p * 4                        # f32 output writeback
            + (n_p // tile_i) * f_out_p * 4            # bias
        ),
    )

    out_p = pl.pallas_call(
        make_aggregate_kernel(tile_k, feats_resident, compute_dtype),
        out_shape=jax.ShapeDtypeStruct((n_p, f_out_p), jnp.float32),
        grid=(n_p // tile_i, n_p // tile_k),           # (row tiles, reduction tiles)
        in_specs=[
            pl.BlockSpec((tile_i, tile_k), lambda i, k: (i, k)),   # A (f32)
            f_spec,                                                # feats (bf16)
            pl.BlockSpec((1, f_out_p), lambda i, k: (0, 0)),       # bias
        ],
        out_specs=pl.BlockSpec((tile_i, f_out_p), lambda i, k: (i, 0)),
        compiler_params=pltpu.CompilerParams(
            dimension_semantics=("parallel", "arbitrary"),
            vmem_limit_bytes=vmem_limit,
        ),
        cost_estimate=cost,
    )(a_p, feats, b_p)

    return out_p[:n, :f_out]


# ------------------------------ module glue ----------------------------------
def build_weighted_adjacency(src, dst, all_edge_type, num_nodes, alpha_emb,
                             wsi=False, padded_num_nodes=None):
    """Plain-JAX glue: edge-type embedding lookups + scatter-add into dense A.

    Builds A directly at the padded (n_p, n_p) shape so the kernel wrapper
    never has to re-pad / re-copy the N^2 matrix.
    """
    n_p = num_nodes if padded_num_nodes is None else padded_num_nodes
    e_total = all_edge_type.shape[0]
    if not wsi:
        train_edge_num = (e_total - num_nodes) // 2
        transpose_all_edge_type = jnp.concatenate(
            (
                all_edge_type[train_edge_num: 2 * train_edge_num],
                all_edge_type[:train_edge_num],
                all_edge_type[-num_nodes:],
            )
        )
    else:
        transpose_all_edge_type = jnp.concatenate(
            (all_edge_type[e_total: 2 * e_total], all_edge_type[:e_total])
        )
    # nn.Embedding(num_relations+1, 1, padding_idx=0) lookups
    alp = alpha_emb[all_edge_type, 0] + alpha_emb[transpose_all_edge_type, 0]  # (E,)
    adj = jnp.zeros((n_p, n_p), dtype=jnp.float32)
    adj = adj.at[dst, src].add(alp)  # out[v] = sum_{e=(u->v)} feats[u]*alp[e]
    return adj


# --------------------------------- main ---------------------------------------
if __name__ == "__main__":
    key = jax.random.PRNGKey(0)
    bf = lambda a: a.astype(jnp.bfloat16).astype(jnp.float32)

    # ---------------- Test 1: SACN-style small graph --------------------------
    num_nodes, in_features, out_features = 32, 16, 32
    num_relations, train_edge_num = 4, 40
    num_edges = 2 * train_edge_num + num_nodes  # fwd + reverse edges + self-loops

    k_src, k_dst, k_type, k_w, k_b, k_a, k_x, k2 = jax.random.split(key, 8)

    src_t = jax.random.randint(k_src, (train_edge_num,), 0, num_nodes)
    dst_t = jax.random.randint(k_dst, (train_edge_num,), 0, num_nodes)
    loops = jnp.arange(num_nodes)
    src = jnp.concatenate([src_t, dst_t, loops]).astype(jnp.int32)
    dst = jnp.concatenate([dst_t, src_t, loops]).astype(jnp.int32)
    all_edge_type = jax.random.randint(
        k_type, (num_edges,), 1, num_relations + 1
    ).astype(jnp.int32)

    stdv = 1.0 / math.sqrt(out_features)
    weight = jax.random.uniform(
        k_w, (in_features, out_features), jnp.float32, -stdv, stdv
    )
    bias = jax.random.uniform(k_b, (out_features,), jnp.float32, -stdv, stdv)
    alpha_emb = jax.random.normal(k_a, (num_relations + 1, 1), jnp.float32)
    alpha_emb = alpha_emb.at[0].set(0.0)  # padding_idx=0
    x = jax.random.normal(k_x, (num_nodes, in_features), jnp.float32)

    n_pad = _round_up(num_nodes, 128)
    adj = build_weighted_adjacency(
        src, dst, all_edge_type, num_nodes, alpha_emb, padded_num_nodes=n_pad
    )

    out = graph_convolution_pallas(adj, x, weight, bias)
    out = jax.block_until_ready(out)
    assert out.shape == (num_nodes, out_features)

    adj_u = adj[:num_nodes, :num_nodes]
    feats_ref = bf(bf(x) @ bf(weight))
    ref_bf16 = bf(adj_u) @ feats_ref + bias
    ref_f32 = adj_u @ (x @ weight) + bias
    assert jnp.allclose(out, ref_bf16, atol=2e-3, rtol=2e-3), "T1 mismatch vs bf16 ref"
    assert jnp.allclose(out, ref_f32, atol=5e-2, rtol=5e-2), "T1 mismatch vs f32 ref"

    # ---------------- Test 2: multi-tile reduction + padded rows --------------
    # n not a multiple of the tile / 128 -> exercises k>0 accumulation, the
    # k==last finalize, padded-row handling, and >=2 row tiles.
    k_a2, k_x2, k_w2, k_b2 = jax.random.split(k2, 4)
    n2, fi2, fo2 = 300, 24, 48
    adj2 = 0.1 * jax.random.normal(k_a2, (n2, n2), jnp.float32)
    x2 = jax.random.normal(k_x2, (n2, fi2), jnp.float32)
    w2 = jax.random.uniform(k_w2, (fi2, fo2), jnp.float32, -0.2, 0.2)
    b2 = jax.random.uniform(k_b2, (fo2,), jnp.float32, -0.2, 0.2)

    out2 = graph_convolution_pallas(adj2, x2, w2, b2, max_tile_i=128, max_tile_k=128)
    out2 = jax.block_until_ready(out2)
    assert out2.shape == (n2, fo2)

    feats2_ref = bf(bf(x2) @ bf(w2))
    ref2_bf16 = bf(adj2) @ feats2_ref + b2
    ref2_f32 = adj2 @ (x2 @ w2) + b2
    assert jnp.allclose(out2, ref2_bf16, atol=2e-3, rtol=2e-3), "T2 mismatch vs bf16 ref"
    assert jnp.allclose(out2, ref2_f32, atol=5e-2, rtol=5e-2), "T2 mismatch vs f32 ref"

    print("KERNEL_OK")
</pallas_src>

<mosaic_0001>
module attributes {stable_mosaic.version = 11 : i64} {
  func.func @project_kernel(%arg0: i32, %arg1: memref<128x128xbf16, #tpu.memory_space<vmem>>, %arg2: memref<128x128xbf16, #tpu.memory_space<vmem>>, %arg3: memref<128x128xbf16, #tpu.memory_space<vmem>>) attributes {dimension_semantics = [#tpu.dimension_semantics<parallel>], iteration_bounds = array<i64: 1>, scalar_prefetch = 0 : i64, scratch_operands = 0 : i64, tpu.core_type = #tpu.core_type<tc>, window_params = [{transform_indices = @transform_0, window_bounds = array<i64: 128, 128>}, {pipeline_mode = #tpu.pipeline_mode<synchronous>, transform_indices = @transform_1, window_bounds = array<i64: 128, 128>}, {transform_indices = @transform_2, window_bounds = array<i64: 128, 128>}]} {
    %c0 = arith.constant 0 : index
    %c0_0 = arith.constant 0 : index
    %0 = vector.load %arg1[%c0, %c0_0] : memref<128x128xbf16, #tpu.memory_space<vmem>>, vector<128x128xbf16>
    %c0_1 = arith.constant 0 : index
    %c0_2 = arith.constant 0 : index
    %1 = vector.load %arg2[%c0_1, %c0_2] : memref<128x128xbf16, #tpu.memory_space<vmem>>, vector<128x128xbf16>
    %cst = arith.constant dense<0.000000e+00> : vector<128x128xf32>
    %2 = tpu.matmul %0, %1, %cst {dimension_numbers = #tpu.dot_dimension_numbers<[1], [0], [0], [1], [0, 0, 1, 1], [], []>} : vector<128x128xbf16>, vector<128x128xbf16>, vector<128x128xf32> -> vector<128x128xf32>
    %3 = arith.truncf %2 : vector<128x128xf32> to vector<128x128xbf16>
    %c0_3 = arith.constant 0 : index
    %c0_4 = arith.constant 0 : index
    %4 = vector.load %arg3[%c0_3, %c0_4] : memref<128x128xbf16, #tpu.memory_space<vmem>>, vector<128x128xbf16>
    tpu.vector_store %arg3[%c0_3, %c0_4], %3 {strides = array<i32>} : memref<128x128xbf16, #tpu.memory_space<vmem>>, vector<128x128xbf16>,
    return
  }
  func.func @transform_0(%arg0: i32) -> (i32, i32) {
    %c0_i32 = arith.constant 0 : i32
    %c0_i32_0 = arith.constant 0 : i32
    return %arg0, %c0_i32 : i32, i32
  }
  func.func @transform_1(%arg0: i32) -> (i32, i32) {
    %c0_i32 = arith.constant 0 : i32
    %c0_i32_0 = arith.constant 0 : i32
    %c0_i32_1 = arith.constant 0 : i32
    return %c0_i32, %c0_i32_0 : i32, i32
  }
  func.func @transform_2(%arg0: i32) -> (i32, i32) {
    %c0_i32 = arith.constant 0 : i32
    %c0_i32_0 = arith.constant 0 : i32
    return %arg0, %c0_i32 : i32, i32
  }
}

</mosaic_0001>

<llo_original>
// kernel: tpu_custom_call.1
$region0: #{tpu_custom_call.1}
  #allocation0 [shape = 'u32[]', space=smem, size = 0x4, offset = 0x4, fixed_abs, tag = 'smem constant byte address 0x4 - core index']
  #allocation1 [shape = 'u32[144,128]{1,0:T(1,128)}', space=vmem, size = 0x12000, scoped, tag = 'internal scratch']
  %s0 = inlined_call_operand.hbm [shape: bf16[128,128], index: 0, kind: input, shape index: {}]
  %s1 = inlined_call_operand.hbm [shape: bf16[128,128], index: 1, kind: input, shape index: {}]
  %s2 = inlined_call_operand.hbm [shape: bf16[128,128], index: 2, kind: output, shape index: {}]
  %s3 = sld [smem:[#allocation0]]
  $region26: #{tpu_custom_call.1} parent=0
    _
  %s5 = ssub.s32 1, %s3
  %s6 = scalar_select 0, %s5, %s3
  $region1: #{tpu_custom_call.1} parent=0
    #allocation2 [shape = 'u8[32768]{0}', space=vmem, size = 0x8000, scoped, tag = 'input window, operand 0, single buffered']
    #allocation3 [shape = 's32[1]{0}', space=sflag, size = 0x4, scoped, tag = 'scoped memory for tpu_custom_call.1']
    #allocation4 [shape = 's32[1]{0}', space=sflag, size = 0x4, scoped, tag = 'scoped memory for tpu_custom_call.1']
    #allocation5 [shape = 'u8[32768]{0}', space=vmem, size = 0x8000, scoped, tag = 'input window, operand 1, single buffered']
    #allocation6 [shape = 's32[1]{0}', space=sflag, size = 0x4, scoped, tag = 'scoped memory for tpu_custom_call.1']
    #allocation7 [shape = 'u8[32768]{0}', space=vmem, size = 0x8000, scoped, tag = 'output window, operand 0, single buffered']
    %7 = vsyncpa [#allocation3], 0
    %8 = vsyncpa [#allocation6], 0
    %9 = vsyncpa [#allocation4], 0
    // Predicated region
    $region2: #{tpu_custom_call.1} parent=1 // pred_check
      _
    $region3: #{tpu_custom_call.1} parent=1 // pred_check_branch
      %11 = sbr.rel (0) target = $region5
    $region4: #{tpu_custom_call.1} parent=1 // pred_region
      %s13 = ssub.s32 1024, 1024
      %14 = vsyncadd [#allocation3], %s13
      %s15 = sshll.u32 [#allocation2], 4
      %s16 = int_to_ptr.vmem [resolvable:$true] %s15
      %21 = dma.hbm_to_vmem [thread:$0]  %s0, 1024, %s16, [#allocation3], 64, 64, 4
    $region5: #{tpu_custom_call.1} parent=1 // pred_fallthru
      _
    // Predicated region
    $region6: #{tpu_custom_call.1} parent=1 // pred_check
      _
    $region7: #{tpu_custom_call.1} parent=1 // pred_check_branch
      %23 = sbr.rel (0) target = $region9
    $region8: #{tpu_custom_call.1} parent=1 // pred_region
      %s25 = ssub.s32 1024, 1024
      %26 = vsyncadd [#allocation6], %s25
      %s27 = sshll.u32 [#allocation5], 4
      %s28 = int_to_ptr.vmem [resolvable:$true] %s27
      %33 = dma.hbm_to_vmem [thread:$0]  %s1, 1024, %s28, [#allocation6], 64, 64, 4
    $region9: #{tpu_custom_call.1} parent=1 // pred_fallthru
      _
    // Predicated region
    $region10: #{tpu_custom_call.1} parent=1 // pred_check
      _
    $region11: #{tpu_custom_call.1} parent=1 // pred_check_branch
      %35 = sbr.rel (0) target = $region13
    $region12: #{tpu_custom_call.1} parent=1 // pred_region
      %36 = dma.done [#allocation3], 1024
    $region13: #{tpu_custom_call.1} parent=1 // pred_fallthru
      _
    // Predicated region
    $region14: #{tpu_custom_call.1} parent=1 // pred_check
      _
    $region15: #{tpu_custom_call.1} parent=1 // pred_check_branch
      %38 = sbr.rel (0) target = $region17
    $region16: #{tpu_custom_call.1} parent=1 // pred_region
      %39 = dma.done [#allocation6], 1024
    $region17: #{tpu_custom_call.1} parent=1 // pred_fallthru
      _
    %v41 = vld [vmem:[#allocation2] sm:$0xf]
    %v42 = vld [vmem:[#allocation2 + $0x4] sm:$0xf]
    %v43 = vld [vmem:[#allocation2 + $0x8] sm:$0xf]
    %v44 = vld [vmem:[#allocation2 + $0xc] sm:$0xf]
    %v45 = vld [vmem:[#allocation2 + $0x10] sm:$0xf]
    %v46 = vld [vmem:[#allocation2 + $0x14] sm:$0xf]
    %v47 = vld [vmem:[#allocation2 + $0x18] sm:$0xf]
    %v48 = vld [vmem:[#allocation2 + $0x1c] sm:$0xf]
    %v49 = vld [vmem:[#allocation2 + $0x20] sm:$0xf]
    %v50 = vld [vmem:[#allocation2 + $0x24] sm:$0xf]
    %v51 = vld [vmem:[#allocation2 + $0x28] sm:$0xf]
    %v52 = vld [vmem:[#allocation2 + $0x2c] sm:$0xf]
    %v53 = vld [vmem:[#allocation2 + $0x30] sm:$0xf]
    %v54 = vld [vmem:[#allocation2 + $0x34] sm:$0xf]
    %v55 = vld [vmem:[#allocation2 + $0x38] sm:$0xf]
    %v56 = vld [vmem:[#allocation2 + $0x3c] sm:$0xf]
    %v57 = vld [vmem:[#allocation5] sm:$0xf]
    %v58 = vld [vmem:[#allocation5 + $0x4] sm:$0xf]
    %v59 = vld [vmem:[#allocation5 + $0x8] sm:$0xf]
    %v60 = vld [vmem:[#allocation5 + $0xc] sm:$0xf]
    %v61 = vld [vmem:[#allocation5 + $0x10] sm:$0xf]
    %v62 = vld [vmem:[#allocation5 + $0x14] sm:$0xf]
    %v63 = vld [vmem:[#allocation5 + $0x18] sm:$0xf]
    %v64 = vld [vmem:[#allocation5 + $0x1c] sm:$0xf]
    %v65 = vld [vmem:[#allocation5 + $0x20] sm:$0xf]
    %v66 = vld [vmem:[#allocation5 + $0x24] sm:$0xf]
    %v67 = vld [vmem:[#allocation5 + $0x28] sm:$0xf]
    %v68 = vld [vmem:[#allocation5 + $0x2c] sm:$0xf]
    %v69 = vld [vmem:[#allocation5 + $0x30] sm:$0xf]
    %v70 = vld [vmem:[#allocation5 + $0x34] sm:$0xf]
    %v71 = vld [vmem:[#allocation5 + $0x38] sm:$0xf]
    %v72 = vld [vmem:[#allocation5 + $0x3c] sm:$0xf]
    %v89 = vunpack.c.l.b16 %v41
    %v90 = vunpack.c.l.b16 %v42
    %v91 = vunpack.c.l.b16 %v43
    %v92 = vunpack.c.l.b16 %v44
    %v93 = vunpack.c.l.b16 %v45
    %v94 = vunpack.c.l.b16 %v46
    %v95 = vunpack.c.l.b16 %v47
    %v96 = vunpack.c.l.b16 %v48
    %v97 = vunpack.c.l.b16 %v49
    %v98 = vunpack.c.l.b16 %v50
    %v99 = vunpack.c.l.b16 %v51
    %v100 = vunpack.c.l.b16 %v52
    %v101 = vunpack.c.l.b16 %v53
    %v102 = vunpack.c.l.b16 %v54
    %v103 = vunpack.c.l.b16 %v55
    %v104 = vunpack.c.l.b16 %v56
    %v105 = vpack.c.b16 %v90, %v89
    %v106 = vpack.c.b16 %v92, %v91
    %v107 = vpack.c.b16 %v94, %v93
    %v108 = vpack.c.b16 %v96, %v95
    %v109 = vpack.c.b16 %v98, %v97
    %v110 = vpack.c.b16 %v100, %v99
    %v111 = vpack.c.b16 %v102, %v101
    %v112 = vpack.c.b16 %v104, %v103
    %v137 = vunpack.c.l.b16 %v57
    %v138 = vunpack.c.l.b16 %v58
    %v139 = vunpack.c.l.b16 %v59
    %v140 = vunpack.c.l.b16 %v60
    %v141 = vunpack.c.l.b16 %v61
    %v142 = vunpack.c.l.b16 %v62
    %v143 = vunpack.c.l.b16 %v63
    %v144 = vunpack.c.l.b16 %v64
    %v145 = vunpack.c.l.b16 %v65
    %v146 = vunpack.c.l.b16 %v66
    %v147 = vunpack.c.l.b16 %v67
    %v148 = vunpack.c.l.b16 %v68
    %v149 = vunpack.c.l.b16 %v69
    %v150 = vunpack.c.l.b16 %v70
    %v151 = vunpack.c.l.b16 %v71
    %v152 = vunpack.c.l.b16 %v72
    %v153 = vpack.c.b16 %v138, %v137
    %v154 = vpack.c.b16 %v140, %v139
    %v155 = vpack.c.b16 %v142, %v141
    %v156 = vpack.c.b16 %v144, %v143
    %v157 = vpack.c.b16 %v146, %v145
    %v158 = vpack.c.b16 %v148, %v147
    %v159 = vpack.c.b16 %v150, %v149
    %v160 = vpack.c.b16 %v152, %v151
    %169 = vmatprep.subr.bf16.mxu0 0
    %170 = vmatpush1.bf16.msra.mxu0 %v160
    %171 = vmatprep.subr.bf16.mxu0 0
    %172 = vmatpush1.bf16.msra.mxu0 %v159
    %173 = vmatprep.subr.bf16.mxu0 0
    %174 = vmatpush1.bf16.msra.mxu0 %v158
    %175 = vmatprep.subr.bf16.mxu0 0
    %176 = vmatpush1.bf16.msra.mxu0 %v157
    %177 = vmatprep.subr.bf16.mxu0 0
    %178 = vmatpush1.bf16.msra.mxu0 %v156
    %179 = vmatprep.subr.bf16.mxu0 0
    %180 = vmatpush1.bf16.msra.mxu0 %v155
    %181 = vmatprep.subr.bf16.mxu0 0
    %182 = vmatpush1.bf16.msra.mxu0 %v154
    %183 = vmatprep.subr.bf16.mxu0 0
    %184 = vmatpush1.bf16.msra.mxu0 %v153
    %185 = vmatprep.subr.bf16.mxu0 0
    %186 = vmatpush2.bf16.msra.mxu0 0
    %187 = vmatprep.subr.bf16.mxu0 0
    %188 = vmatpush2.bf16.msra.mxu0 0
    %189 = vmatprep.subr.bf16.mxu0 0
    %190 = vmatpush2.bf16.msra.mxu0 0
    %191 = vmatprep.subr.bf16.mxu0 0
    %192 = vmatpush2.bf16.msra.mxu0 0
    %193 = vmatprep.subr.bf16.mxu0 0
    %194 = vmatpush2.bf16.msra.mxu0 0
    %195 = vmatprep.subr.bf16.mxu0 0
    %196 = vmatpush2.bf16.msra.mxu0 0
    %197 = vmatprep.subr.bf16.mxu0 0
    %198 = vmatpush2.bf16.msra.mxu0 0
    %199 = vmatprep.subr.bf16.mxu0 0
    %200 = vmatpush2.bf16.msra.mxu0 0
    %201 = vmatprep.mubr.bf16.mxu0 0
    %202 = vmatmul.mubr.bf16.gmra.mxu0 %v105
    %v203 = vpop.f32.mrf.mxu0
    %v204 = vadd.f32 0.0, %v203
    %v205 = vpop.f32.mrf.mxu0
    %v206 = vpop.f32.mrf.mxu0
    %v207 = vadd.f32 0.0, %v206
    %v208 = vpop.f32.mrf.mxu0
    %209 = vmatprep.mubr.bf16.mxu0 0
    %210 = vmatmul.mubr.bf16.gmra.mxu0 %v106
    %v211 = vpop.f32.mrf.mxu0
    %v212 = vadd.f32 0.0, %v211
    %v213 = vpop.f32.mrf.mxu0
    %v214 = vpop.f32.mrf.mxu0
    %v215 = vadd.f32 0.0, %v214
    %v216 = vpop.f32.mrf.mxu0
    %217 = vmatprep.mubr.bf16.mxu0 0
    %218 = vmatmul.mubr.bf16.gmra.mxu0 %v107
    %v219 = vpop.f32.mrf.mxu0
    %v220 = vadd.f32 0.0, %v219
    %v221 = vpop.f32.mrf.mxu0
    %v222 = vpop.f32.mrf.mxu0
    %v223 = vadd.f32 0.0, %v222
    %v224 = vpop.f32.mrf.mxu0
    %225 = vmatprep.mubr.bf16.mxu0 0
    %226 = vmatmul.mubr.bf16.gmra.mxu0 %v108
    %v227 = vpop.f32.mrf.mxu0
    %v228 = vadd.f32 0.0, %v227
    %v229 = vpop.f32.mrf.mxu0
    %v230 = vpop.f32.mrf.mxu0
    %v231 = vadd.f32 0.0, %v230
    %v232 = vpop.f32.mrf.mxu0
    %233 = vmatprep.mubr.bf16.mxu0 0
    %234 = vmatmul.mubr.bf16.gmra.mxu0 %v109
    %v235 = vpop.f32.mrf.mxu0
    %v236 = vadd.f32 0.0, %v235
    %v237 = vpop.f32.mrf.mxu0
    %v238 = vpop.f32.mrf.mxu0
    %v239 = vadd.f32 0.0, %v238
    %v240 = vpop.f32.mrf.mxu0
    %241 = vmatprep.mubr.bf16.mxu0 0
    %242 = vmatmul.mubr.bf16.gmra.mxu0 %v110
    %v243 = vpop.f32.mrf.mxu0
    %v244 = vadd.f32 0.0, %v243
    %v245 = vpop.f32.mrf.mxu0
    %v246 = vpop.f32.mrf.mxu0
    %v247 = vadd.f32 0.0, %v246
    %v248 = vpop.f32.mrf.mxu0
    %249 = vmatprep.mubr.bf16.mxu0 0
    %250 = vmatmul.mubr.bf16.gmra.mxu0 %v111
    %v251 = vpop.f32.mrf.mxu0
    %v252 = vadd.f32 0.0, %v251
    %v253 = vpop.f32.mrf.mxu0
    %v254 = vpop.f32.mrf.mxu0
    %v255 = vadd.f32 0.0, %v254
    %v256 = vpop.f32.mrf.mxu0
    %257 = vmatprep.mubr.bf16.mxu0 0
    %258 = vmatmul.mubr.bf16.gmra.mxu0 %v112
    %v259 = vpop.f32.mrf.mxu0
    %v260 = vadd.f32 0.0, %v259
    %v261 = vpop.f32.mrf.mxu0
    %v262 = vpop.f32.mrf.mxu0
    %v263 = vadd.f32 0.0, %v262
    %v264 = vpop.f32.mrf.mxu0
    %265 = vdwg.mxu0
    %v266 = vpack.c.bf16 %v207, %v204
    %v267 = vpack.c.bf16 %v215, %v212
    %v268 = vpack.c.bf16 %v223, %v220
    %v269 = vpack.c.bf16 %v231, %v228
    %v270 = vpack.c.bf16 %v239, %v236
    %v271 = vpack.c.bf16 %v247, %v244
    %v272 = vpack.c.bf16 %v255, %v252
    %v273 = vpack.c.bf16 %v263, %v260
    %v282 = vunpack.c.l.b16 %v266
    %v283 = vunpack.c.h.b16 %v266
    %v284 = vunpack.c.l.b16 %v267
    %v285 = vunpack.c.h.b16 %v267
    %v286 = vunpack.c.l.b16 %v268
    %v287 = vunpack.c.h.b16 %v268
    %v288 = vunpack.c.l.b16 %v269
    %v289 = vunpack.c.h.b16 %v269
    %v290 = vunpack.c.l.b16 %v270
    %v291 = vunpack.c.h.b16 %v270
    %v292 = vunpack.c.l.b16 %v271
    %v293 = vunpack.c.h.b16 %v271
    %v294 = vunpack.c.l.b16 %v272
    %v295 = vunpack.c.h.b16 %v272
    %v296 = vunpack.c.l.b16 %v273
    %v297 = vunpack.c.h.b16 %v273
    %v298 = vpack.c.b16 %v282, %v282
    %v299 = vpack.c.b16 %v283, %v283
    %v300 = vpack.c.b16 %v284, %v284
    %v301 = vpack.c.b16 %v285, %v285
    %v302 = vpack.c.b16 %v286, %v286
    %v303 = vpack.c.b16 %v287, %v287
    %v304 = vpack.c.b16 %v288, %v288
    %v305 = vpack.c.b16 %v289, %v289
    %v306 = vpack.c.b16 %v290, %v290
    %v307 = vpack.c.b16 %v291, %v291
    %v308 = vpack.c.b16 %v292, %v292
    %v309 = vpack.c.b16 %v293, %v293
    %v310 = vpack.c.b16 %v294, %v294
    %v311 = vpack.c.b16 %v295, %v295
    %v312 = vpack.c.b16 %v296, %v296
    %v313 = vpack.c.b16 %v297, %v297
    %330 = vst [vmem:[#allocation7] sm:$0xf] %v298
    %331 = vst [vmem:[#allocation7 + $0x4] sm:$0xf] %v299
    %332 = vst [vmem:[#allocation7 + $0x8] sm:$0xf] %v300
    %333 = vst [vmem:[#allocation7 + $0xc] sm:$0xf] %v301
    %334 = vst [vmem:[#allocation7 + $0x10] sm:$0xf] %v302
    %335 = vst [vmem:[#allocation7 + $0x14] sm:$0xf] %v303
    %336 = vst [vmem:[#allocation7 + $0x18] sm:$0xf] %v304
    %337 = vst [vmem:[#allocation7 + $0x1c] sm:$0xf] %v305
    %338 = vst [vmem:[#allocation7 + $0x20] sm:$0xf] %v306
    %339 = vst [vmem:[#allocation7 + $0x24] sm:$0xf] %v307
    %340 = vst [vmem:[#allocation7 + $0x28] sm:$0xf] %v308
    %341 = vst [vmem:[#allocation7 + $0x2c] sm:$0xf] %v309
    %342 = vst [vmem:[#allocation7 + $0x30] sm:$0xf] %v310
    %343 = vst [vmem:[#allocation7 + $0x34] sm:$0xf] %v311
    %344 = vst [vmem:[#allocation7 + $0x38] sm:$0xf] %v312
    %345 = vst [vmem:[#allocation7 + $0x3c] sm:$0xf] %v313
    // Predicated region
    $region18: #{tpu_custom_call.1} parent=1 // pred_check
      _
    $region19: #{tpu_custom_call.1} parent=1 // pred_check_branch
      %347 = sbr.rel (0) target = $region21
    $region20: #{tpu_custom_call.1} parent=1 // pred_region
      %s349 = ssub.s32 1024, 1024
      %350 = vsyncadd [#allocation4], %s349
      %s351 = sshll.u32 [#allocation7], 4
      %s352 = int_to_ptr.vmem [resolvable:$true] %s351
      %357 = dma.vmem_to_hbm [thread:$0]  %s352, 1024, %s2, [#allocation4], 64, 64, 4
    $region21: #{tpu_custom_call.1} parent=1 // pred_fallthru
      _
    // Predicated region
    $region22: #{tpu_custom_call.1} parent=1 // pred_check
      _
    $region23: #{tpu_custom_call.1} parent=1 // pred_check_branch
      %359 = sbr.rel (0) target = $region25
    $region24: #{tpu_custom_call.1} parent=1 // pred_region
      %360 = dma.done [#allocation4], 1024
    $region25: #{tpu_custom_call.1} parent=1 // pred_fallthru
      _
    %361 = vsyncpa [#allocation3], 1
    %362 = vsyncpa [#allocation6], 1
    %363 = vsyncpa [#allocation4], 1

</llo_original>
